<compile_context>
chip_gen: v5e
topology: v5e:2x2
jax: 0.10.0
libtpu: 0.0.40
codegen_flags: <defaults>
</compile_context>

<pallas_src>
import functools

import jax
import jax.numpy as jnp
from jax.experimental import pallas as pl
from jax.experimental.pallas import tpu as pltpu


def _round_up(v, m):
    return (v + m - 1) // m * m


def _device_vmem_bytes():
    """Per-core VMEM capacity; conservative fallback if the query fails."""
    try:
        return int(pltpu.get_tpu_info().vmem_capacity_bytes)
    except Exception:
        return 64 << 20  # v7x per-TensorCore VMEM (the smallest of v5e/v6e/v7x)


def _pooled_sums_f32(x):
    """Sum over the last (lane) axis in f32.

    For low-precision inputs the upcast is done in lane chunks so we never
    materialize a full-size f32 copy of the block (that temporary was 2x the
    bf16 block and the likeliest source of VMEM pressure on v7x)."""
    if x.dtype == jnp.float32:
        return jnp.sum(x, axis=-1, keepdims=True)
    hw = x.shape[-1]
    chunk = 2048
    if hw > 32 * chunk:           # cap the unroll for huge spatial extents
        chunk = -(-hw // 32)
    acc = jnp.zeros(x.shape[:-1] + (1,), jnp.float32)
    start = 0
    while start < hw:             # static Python loop: chunk count is static
        size = min(chunk, hw - start)
        acc = acc + jnp.sum(x[..., start:start + size].astype(jnp.float32),
                            axis=-1, keepdims=True)
        start += size
    return acc


# ---------------------------------------------------------------------------
# Path A: fused single pass (read x once, gate, write once) — the default.
# ---------------------------------------------------------------------------
def _eca_fused_kernel(x_ref, w_ref, o_ref, *, hw_true, c_true):
    # x_ref/o_ref: (BT, C_blk, HW) blocks; w_ref: (3,) f32 Conv1d taps in SMEM.
    x = x_ref[...]
    bt, cb, _ = x.shape

    # Global average pool over the spatial (lane) axis, f32 accumulation.
    y = _pooled_sums_f32(x) * jnp.float32(1.0 / hw_true)          # (BT, cb, 1)

    # If the channel block was rounded up past C, the extra rows hold garbage
    # from the partial input block: zero their pooled value so the 3-tap conv
    # at row C-1 sees Conv1d's zero padding exactly.  (Their outputs are OOB
    # and dropped by Pallas on write-back.)
    if cb != c_true:
        ch = jax.lax.broadcasted_iota(jnp.int32, y.shape, 1)
        y = jnp.where(ch < c_true, y, 0.0)

    # 3-tap cross-correlation along channels with zero padding:
    #   z[c] = w0*y[c-1] + w1*y[c] + w2*y[c+1]
    # Tiny (BT, cb, 1) math — deliberately left simple (never the bottleneck).
    zero = jnp.zeros((bt, 1, 1), jnp.float32)
    y_prev = jnp.concatenate([zero, y[:, :cb - 1, :]], axis=1)
    y_next = jnp.concatenate([y[:, 1:, :], zero], axis=1)
    z = w_ref[0] * y_prev + w_ref[1] * y + w_ref[2] * y_next
    gate = jax.nn.sigmoid(z)                                       # f32

    # Gate broadcast over the spatial axis.  Multiply in the input dtype so a
    # bf16 input stays bf16 end-to-end (half the HBM traffic); the f32->bf16
    # gate cast is well within tolerance for a sigmoid in [0, 1].
    o_ref[...] = (x * gate.astype(x.dtype)).astype(o_ref.dtype)


def _pick_batch_tile(n, per_sample_bytes, budget):
    """Fold several batch elements per block for tiny feature maps (amortizes
    the ~0.35us per-grid-step overhead on v5e), but keep >=2 grid steps when
    N>=2 so 'parallel' can still shard across v7x's two TensorCores."""
    best = 1
    for bt in range(2, n + 1):
        if n % bt:
            continue
        if n >= 2 and n // bt < 2:
            continue
        if 4 * bt * per_sample_bytes + (8 << 20) > budget:
            continue
        best = bt
    return best


def _eca_fused(x, conv_w, N, C, HW, c_blk, itemsize, cap, budget):
    per_sample = c_blk * HW * itemsize
    bt = _pick_batch_tile(N, per_sample, budget)
    block_bytes = bt * per_sample
    # in + out, double-buffered, plus slack for in-kernel temporaries.
    vmem_limit = int(min(cap - (2 << 20),
                         max(4 * block_bytes + (16 << 20), 32 << 20)))

    kernel = functools.partial(_eca_fused_kernel, hw_true=HW, c_true=C)
    return pl.pallas_call(
        kernel,
        out_shape=jax.ShapeDtypeStruct((N, C, HW), x.dtype),
        grid_spec=pltpu.PrefetchScalarGridSpec(
            num_scalar_prefetch=0,
            grid=(N // bt,),
            in_specs=[
                pl.BlockSpec((bt, c_blk, HW), lambda n: (n, 0, 0)),
                pl.BlockSpec(memory_space=pltpu.MemorySpace.SMEM),
            ],
            out_specs=pl.BlockSpec((bt, c_blk, HW), lambda n: (n, 0, 0)),
        ),
        compiler_params=pltpu.CompilerParams(
            dimension_semantics=("parallel",),
            vmem_limit_bytes=vmem_limit,
        ),
        cost_estimate=pl.CostEstimate(
            flops=2 * N * C * HW + 6 * N * C,
            transcendentals=N * C,
            bytes_accessed=2 * N * C * HW * itemsize,
        ),
    )(x, conv_w)


# ---------------------------------------------------------------------------
# Path B: channel-tiled two-pass route (VMEM overflow on v7x, or N==1 so both
# v7x TensorCores get work).  Pass 1 pools per channel tile, the tiny (N, C)
# conv+sigmoid gate is computed in plain XLA, pass 2 is a pure elementwise
# gate kernel.  Costs one extra read of x vs. the fused path, but bounds VMEM
# independently of C*HW.
# ---------------------------------------------------------------------------
def _eca_pool_kernel(x_ref, sums_ref):
    sums_ref[...] = _pooled_sums_f32(x_ref[...])     # (1, CT, 1) f32 sums


def _eca_gate_kernel(x_ref, g_ref, o_ref):
    x = x_ref[...]
    o_ref[...] = (x * g_ref[...].astype(x.dtype)).astype(o_ref.dtype)


def _eca_tiled(x, conv_w, N, C, HW, itemsize, cap, budget, c_tile):
    if c_tile is None:
        ct = (budget - (8 << 20)) // (4 * HW * itemsize)
        ct = max(8, (ct // 8) * 8)
    else:
        ct = max(8, _round_up(int(c_tile), 8))
    ct = min(ct, _round_up(C, 8))
    n_ct = pl.cdiv(C, ct)
    c_pad = n_ct * ct
    block_bytes = ct * HW * itemsize
    vmem_limit = int(min(cap - (2 << 20),
                         max(4 * block_bytes + (16 << 20), 32 << 20)))
    # TODO(synk): if even a single 8-channel tile overflows VMEM (HW beyond
    # ~5e5 f32 elements) this path would also need spatial tiling with a
    # masked accumulation; not implemented.

    # Pass 1: pooled sums per (sample, channel tile).  The last tile's OOB
    # channel rows read garbage, but it lands in the padded tail of `sums`
    # which is sliced off before the conv.
    sums = pl.pallas_call(
        _eca_pool_kernel,
        out_shape=jax.ShapeDtypeStruct((N, c_pad, 1), jnp.float32),
        grid_spec=pltpu.PrefetchScalarGridSpec(
            num_scalar_prefetch=0,
            grid=(N, n_ct),
            in_specs=[pl.BlockSpec((1, ct, HW), lambda n, c: (n, c, 0))],
            out_specs=pl.BlockSpec((1, ct, 1), lambda n, c: (n, c, 0)),
        ),
        compiler_params=pltpu.CompilerParams(
            dimension_semantics=("parallel", "parallel"),
            vmem_limit_bytes=vmem_limit,
        ),
        cost_estimate=pl.CostEstimate(
            flops=N * C * HW, transcendentals=0,
            bytes_accessed=N * C * HW * itemsize),
    )(x)

    # Tiny (N, C) gate: Conv1d(k=3, zero pad, no bias) + sigmoid in plain XLA.
    y = sums[:, :C, 0] * (1.0 / HW)
    yp = jnp.pad(y, ((0, 0), (1, 1)))
    z = conv_w[0] * yp[:, :-2] + conv_w[1] * yp[:, 1:-1] + conv_w[2] * yp[:, 2:]
    gate = jax.nn.sigmoid(z)                                      # (N, C) f32
    gate = jnp.pad(gate, ((0, 0), (0, c_pad - C)))[..., None]     # (N,c_pad,1)

    # Pass 2: elementwise gating, fully parallel over (sample, channel tile).
    return pl.pallas_call(
        _eca_gate_kernel,
        out_shape=jax.ShapeDtypeStruct((N, C, HW), x.dtype),
        grid_spec=pltpu.PrefetchScalarGridSpec(
            num_scalar_prefetch=0,
            grid=(N, n_ct),
            in_specs=[
                pl.BlockSpec((1, ct, HW), lambda n, c: (n, c, 0)),
                pl.BlockSpec((1, ct, 1), lambda n, c: (n, c, 0)),
            ],
            out_specs=pl.BlockSpec((1, ct, HW), lambda n, c: (n, c, 0)),
        ),
        compiler_params=pltpu.CompilerParams(
            dimension_semantics=("parallel", "parallel"),
            vmem_limit_bytes=vmem_limit,
        ),
        cost_estimate=pl.CostEstimate(
            flops=N * C * HW, transcendentals=0,
            bytes_accessed=2 * N * C * HW * itemsize),
    )(x, gate)


# ---------------------------------------------------------------------------
# Public wrapper
# ---------------------------------------------------------------------------
def eca_block(x_nchw, conv_w, *, force_tiled=False, c_tile=None):
    """x_nchw: (N, C, H, W) float32 or bfloat16.
    conv_w: (3,) Conv1d(1,1,3,bias=False) weight squeezed."""
    N, C, H, W = x_nchw.shape
    HW = H * W
    x = x_nchw.reshape(N, C, HW)              # reshape only; no pad/copy of x
    conv_w = jnp.asarray(conv_w, jnp.float32).reshape(-1)
    itemsize = x.dtype.itemsize

    cap = _device_vmem_bytes()
    budget = max(int(cap * 0.75), 16 << 20)

    c_blk = _round_up(C, 8)
    per_sample = c_blk * HW * itemsize

    use_fused = (not force_tiled) and (4 * per_sample + (8 << 20) <= budget)
    # v7x has 2 TensorCores: for a single big sample, channel-tiling gives the
    # second core work (the fused path would leave it idle).
    if use_fused and N == 1 and C >= 16 and per_sample >= (8 << 20):
        use_fused = False
    # TODO(synk): a fused channel-tiled variant (CT+2 halo input spec) would
    # avoid Path B's extra read of x; not implemented.

    if use_fused:
        out = _eca_fused(x, conv_w, N, C, HW, c_blk, itemsize, cap, budget)
    else:
        out = _eca_tiled(x, conv_w, N, C, HW, itemsize, cap, budget, c_tile)
    return out.reshape(N, C, H, W)


def eca_reference(x_nchw, conv_w):
    """Plain-JAX (f32) reference mirroring the PyTorch module."""
    x = x_nchw.astype(jnp.float32)
    cw = jnp.asarray(conv_w, jnp.float32).reshape(-1)
    y = jnp.mean(x, axis=(2, 3))                                  # (N, C)
    yp = jnp.pad(y, ((0, 0), (1, 1)))                             # zero pad
    z = cw[0] * yp[:, :-2] + cw[1] * yp[:, 1:-1] + cw[2] * yp[:, 2:]
    s = jax.nn.sigmoid(z)
    return x * s[:, :, None, None]


if __name__ == "__main__":
    key = jax.random.PRNGKey(0)
    kx, kw, kx2 = jax.random.split(key, 3)

    conv_w = jax.random.normal(kw, (3,), dtype=jnp.float32) * 0.5

    # 1) fused single-pass path, float32 (N,C,H,W) = (2,4,16,16).
    x32 = jax.random.normal(kx, (2, 4, 16, 16), dtype=jnp.float32)
    out32 = jax.block_until_ready(eca_block(x32, conv_w))
    ref32 = eca_reference(x32, conv_w)
    assert out32.shape == x32.shape and out32.dtype == x32.dtype
    assert jnp.allclose(out32, ref32, atol=1e-5, rtol=1e-5), "f32 fused mismatch"

    # 2) fused path, bfloat16 (half the HBM traffic; pool/conv/sigmoid in f32).
    x16 = x32.astype(jnp.bfloat16)
    out16 = jax.block_until_ready(eca_block(x16, conv_w))
    ref16 = eca_reference(x16, conv_w)
    assert out16.shape == x16.shape and out16.dtype == jnp.bfloat16
    assert jnp.allclose(out16.astype(jnp.float32), ref16, atol=5e-2, rtol=5e-2), \
        "bf16 fused mismatch"

    # 3) channel-tiled two-pass path (the v7x / VMEM-overflow route), forced on
    #    a small problem so it is exercised: C=20 with ct=8 -> 3 tiles (last
    #    partial), HW=144 is not a multiple of 128.
    xt = jax.random.normal(kx2, (2, 20, 12, 12), dtype=jnp.float32)
    outt = jax.block_until_ready(eca_block(xt, conv_w, force_tiled=True, c_tile=8))
    reft = eca_reference(xt, conv_w)
    assert outt.shape == xt.shape and outt.dtype == xt.dtype
    assert jnp.allclose(outt, reft, atol=1e-5, rtol=1e-5), "tiled path mismatch"

    print("KERNEL_OK")
</pallas_src>

<mosaic_0001>
module attributes {stable_mosaic.version = 11 : i64} {
  func.func @_eca_fused_kernel(%arg0: i32, %arg1: memref<1x8x256xf32, #tpu.memory_space<vmem>>, %arg2: memref<3xf32, #tpu.memory_space<smem>>, %arg3: memref<1x8x256xf32, #tpu.memory_space<vmem>>) attributes {dimension_semantics = [#tpu.dimension_semantics<parallel>], iteration_bounds = array<i64: 2>, scalar_prefetch = 0 : i64, scratch_operands = 0 : i64, tpu.core_type = #tpu.core_type<tc>, window_params = [{transform_indices = @transform_0, window_bounds = array<i64: 1, 8, 256>}, {transform_indices = @transform_1, window_bounds = array<i64: 3>}, {transform_indices = @transform_2, window_bounds = array<i64: 1, 8, 256>}]} {
    %c0 = arith.constant 0 : index
    %c0_0 = arith.constant 0 : index
    %c0_1 = arith.constant 0 : index
    %0 = vector.load %arg1[%c0, %c0_0, %c0_1] : memref<1x8x256xf32, #tpu.memory_space<vmem>>, vector<1x8x256xf32>
    %cst = arith.constant dense<0.000000e+00> : vector<1x8xf32>
    %1 = vector.multi_reduction <add>, %0, %cst [2] : vector<1x8x256xf32> to vector<1x8xf32>
    %2 = vector.shape_cast %1 : vector<1x8xf32> to vector<1x8x1xf32>
    %cst_2 = arith.constant 3.906250e-03 : f32
    %3 = vector.broadcast %cst_2 : f32 to vector<1x8x1xf32>
    %4 = arith.mulf %2, %3 : vector<1x8x1xf32>
    %5 = tpu.iota {dimensions = array<i32: 1>} : vector<1x8x1xi32>
    %c4_i32 = arith.constant 4 : i32
    %6 = vector.broadcast %c4_i32 : i32 to vector<1x8x1xi32>
    %7 = arith.cmpi slt, %5, %6 : vector<1x8x1xi32>
    %cst_3 = arith.constant 0.000000e+00 : f32
    %8 = vector.broadcast %cst_3 : f32 to vector<1x8x1xf32>
    %9 = arith.select %7, %4, %8 : vector<1x8x1xi1>, vector<1x8x1xf32>
    %cst_4 = arith.constant 0.000000e+00 : f32
    %10 = vector.broadcast %cst_4 : f32 to vector<1x1x1xf32>
    %11 = vector.extract_strided_slice %9 {offsets = [0, 0, 0], sizes = [1, 7, 1], strides = [1, 1, 1]} : vector<1x8x1xf32> to vector<1x7x1xf32>
    %12 = tpu.concatenate %10, %11 in 1 : vector<1x1x1xf32>, vector<1x7x1xf32> -> vector<1x8x1xf32>
    %13 = vector.extract_strided_slice %9 {offsets = [0, 1, 0], sizes = [1, 7, 1], strides = [1, 1, 1]} : vector<1x8x1xf32> to vector<1x7x1xf32>
    %14 = tpu.concatenate %13, %10 in 1 : vector<1x7x1xf32>, vector<1x1x1xf32> -> vector<1x8x1xf32>
    %c0_5 = arith.constant 0 : index
    %15 = memref.load %arg2[%c0_5] : memref<3xf32, #tpu.memory_space<smem>>
    %16 = vector.broadcast %15 : f32 to vector<1x8x1xf32>
    %17 = arith.mulf %16, %12 : vector<1x8x1xf32>
    %c1 = arith.constant 1 : index
    %18 = memref.load %arg2[%c1] : memref<3xf32, #tpu.memory_space<smem>>
    %19 = vector.broadcast %18 : f32 to vector<1x8x1xf32>
    %20 = arith.mulf %19, %9 : vector<1x8x1xf32>
    %21 = arith.addf %17, %20 : vector<1x8x1xf32>
    %c2 = arith.constant 2 : index
    %22 = memref.load %arg2[%c2] : memref<3xf32, #tpu.memory_space<smem>>
    %23 = vector.broadcast %22 : f32 to vector<1x8x1xf32>
    %24 = arith.mulf %23, %14 : vector<1x8x1xf32>
    %25 = arith.addf %21, %24 : vector<1x8x1xf32>
    %26 = arith.negf %25 : vector<1x8x1xf32>
    %27 = math.exp %26 : vector<1x8x1xf32>
    %cst_6 = arith.constant 1.000000e+00 : f32
    %28 = vector.broadcast %cst_6 : f32 to vector<1x8x1xf32>
    %29 = arith.addf %28, %27 : vector<1x8x1xf32>
    %30 = arith.divf %28, %29 : vector<1x8x1xf32>
    %31 = vector.broadcast %30 : vector<1x8x1xf32> to vector<1x8x256xf32>
    %32 = arith.mulf %0, %31 : vector<1x8x256xf32>
    %c0_7 = arith.constant 0 : index
    %c0_8 = arith.constant 0 : index
    %c0_9 = arith.constant 0 : index
    %33 = vector.load %arg3[%c0_7, %c0_8, %c0_9] : memref<1x8x256xf32, #tpu.memory_space<vmem>>, vector<1x8x256xf32>
    tpu.vector_store %arg3[%c0_7, %c0_8, %c0_9], %32 {strides = array<i32>} : memref<1x8x256xf32, #tpu.memory_space<vmem>>, vector<1x8x256xf32>,
    return
  }
  func.func @transform_0(%arg0: i32) -> (i32, i32, i32) {
    %c0_i32 = arith.constant 0 : i32
    %c0_i32_0 = arith.constant 0 : i32
    %c0_i32_1 = arith.constant 0 : i32
    return %arg0, %c0_i32, %c0_i32_0 : i32, i32, i32
  }
  func.func @transform_1(%arg0: i32) -> i32 {
    %c0_i32 = arith.constant 0 : i32
    %c0_i32_0 = arith.constant 0 : i32
    return %c0_i32 : i32
  }
  func.func @transform_2(%arg0: i32) -> (i32, i32, i32) {
    %c0_i32 = arith.constant 0 : i32
    %c0_i32_0 = arith.constant 0 : i32
    %c0_i32_1 = arith.constant 0 : i32
    return %arg0, %c0_i32, %c0_i32_0 : i32, i32, i32
  }
}

</mosaic_0001>

<llo_original>
// kernel: tpu_custom_call.1
$region0: #{tpu_custom_call.1}
  #allocation0 [shape = 'u32[]', space=smem, size = 0x4, offset = 0x4, fixed_abs, tag = 'smem constant byte address 0x4 - core index']
  #allocation1 [shape = 'u32[72,128]{1,0:T(1,128)}', space=vmem, size = 0x9000, scoped, tag = 'internal scratch']
  %s0 = inlined_call_operand.hbm [shape: f32[2,4,256], index: 0, kind: input, shape index: {}]
  %s1 = inlined_call_operand.hbm [shape: f32[3], index: 1, kind: input, shape index: {}]
  %s2 = inlined_call_operand.hbm [shape: f32[2,4,256], index: 2, kind: output, shape index: {}]
  %s3 = sld [smem:[#allocation0]]
  $region49: #{tpu_custom_call.1} parent=0
    _
  %s5 = ssub.s32 1, %s3
  %s6 = scalar_select 0, %s5, %s3
  $region1: #{tpu_custom_call.1} parent=0
    #allocation2 [shape = 'u8[16384]{0}', space=vmem, size = 0x4000, scoped, tag = 'input window, operand 0']
    #allocation3 [shape = 's32[2]{0}', space=sflag, size = 0x8, scoped, tag = 'scoped memory for tpu_custom_call.1']
    #allocation4 [shape = 's32[2]{0}', space=sflag, size = 0x8, scoped, tag = 'scoped memory for tpu_custom_call.1']
    #allocation5 [shape = 's32[2]{0}', space=sflag, size = 0x8, scoped, tag = 'scoped memory for tpu_custom_call.1']
    #allocation6 [shape = 'u8[512]{0}', space=smem, size = 0x200, scoped, tag = 'input window, operand 1, single buffered']
    #allocation7 [shape = 'u8[16384]{0}', space=vmem, size = 0x4000, scoped, tag = 'output window, operand 0']
    %7 = vsyncpa [#allocation3], 0
    %s8 = scalar_lea.sflag [#allocation3], 1
    %9 = vsyncpa %s8, 0
    %10 = vsyncpa [#allocation5], 0
    %11 = vsyncpa [#allocation4], 0
    %s12 = scalar_lea.sflag [#allocation4], 1
    %13 = vsyncpa %s12, 0
    loop: start=0, step=1, limit=4
    $region2: #{tpu_custom_call.1} parent=1 // loop_pre_header
      _
    $region3: #{tpu_custom_call.1} parent=1 // loop_header
      %s15 = sphi 0, %s19
      %p16 = scmp.ge.s32.totalorder %s15, 4
      %s25 = sphi 0, %s27
      %s28 = sphi 0, %s25
      %s29 = sphi 0, %s28
      %s45 = sphi 0, %s29
      %s49 = sphi 0, %s49
      %s51 = sphi 0, %s49
      %s52 = sphi 0, %s51
      %s66 = sphi 0, %s52
      %s72 = sphi 0, %s74
      %s75 = sphi 0, %s72
      %s76 = sphi 0, %s75
      %s92 = sphi 0, %s76
    $region4: #{tpu_custom_call.1} parent=1 // loop_header_branch
      %18 = sbr.rel (%p16) target = $region8
    $region5: #{tpu_custom_call.1} parent=1 // loop_body
      %s20 = ssub.s32 %s15, 1
      %s21 = ssub.s32 %s15, 2
      %s22 = sadd.s32 %s15, 1
      %s23 = ssub.s32 %s15, %s22
      %p24 = scmp.eq.s32.totalorder %s23, 0
      %s26 = sadd.s32 %s25, 1
      %s27 = scalar_select %p24, %s25, %s26
      %p30 = pneg %p24
      %p31 = scmp.eq.s32.totalorder %s15, 1
      %p32 = por %p30, %p31
      %p33 = scmp.ne.s32.totalorder %s25, %s28
      %p34 = scmp.eq.s32.totalorder %s15, 0
      %p35 = por %p33, %p34
      %p36 = scmp.ne.s32.totalorder %s25, %s28
      %p37 = scmp.eq.s32.totalorder %s20, 1
      %p38 = por %p36, %p37
      %p39 = scmp.ne.s32.totalorder %s28, %s29
      %p40 = scmp.eq.s32.totalorder %s20, 0
      %p41 = por %p39, %p40
      %p42 = scmp.ne.s32.totalorder %s28, %s29
      %p43 = scmp.eq.s32.totalorder %s21, 1
      %p44 = por %p42, %p43
      %p46 = scmp.ne.s32.totalorder %s29, %s45
      %p47 = scmp.eq.s32.totalorder %s21, 0
      %p48 = por %p46, %p47
      %s50 = sadd.s32 %s49, 1
      %p53 = scmp.eq.s32.totalorder %s15, 1
      %p54 = scmp.ne.s32.totalorder %s49, %s51
      %p55 = scmp.eq.s32.totalorder %s15, 0
      %p56 = por %p54, %p55
      %p57 = scmp.ne.s32.totalorder %s49, %s51
      %p58 = scmp.eq.s32.totalorder %s20, 1
      %p59 = por %p57, %p58
      %p60 = scmp.ne.s32.totalorder %s51, %s52
      %p61 = scmp.eq.s32.totalorder %s20, 0
      %p62 = por %p60, %p61
      %p63 = scmp.ne.s32.totalorder %s51, %s52
      %p64 = scmp.eq.s32.totalorder %s21, 1
      %p65 = por %p63, %p64
      %p67 = scmp.ne.s32.totalorder %s52, %s66
      %p68 = scmp.eq.s32.totalorder %s21, 0
      %p69 = por %p67, %p68
      %s70 = ssub.s32 %s15, %s22
      %p71 = scmp.eq.s32.totalorder %s70, 0
      %s73 = sadd.s32 %s72, 1
      %s74 = scalar_select %p71, %s72, %s73
      %p77 = pneg %p71
      %p78 = scmp.eq.s32.totalorder %s15, 1
      %p79 = por %p77, %p78
      %p80 = scmp.ne.s32.totalorder %s72, %s75
      %p81 = scmp.eq.s32.totalorder %s15, 0
      %p82 = por %p80, %p81
      %p83 = scmp.ne.s32.totalorder %s72, %s75
      %p84 = scmp.eq.s32.totalorder %s20, 1
      %p85 = por %p83, %p84
      %p86 = scmp.ne.s32.totalorder %s75, %s76
      %p87 = scmp.eq.s32.totalorder %s20, 0
      %p88 = por %p86, %p87
      %p89 = scmp.ne.s32.totalorder %s75, %s76
      %p90 = scmp.eq.s32.totalorder %s21, 1
      %p91 = por %p89, %p90
      %p93 = scmp.ne.s32.totalorder %s76, %s92
      %p94 = scmp.eq.s32.totalorder %s21, 0
      %p95 = por %p93, %p94
      %p96 = scmp.le.s32.totalorder 1, %s15
      %p97 = scmp.lt.s32.totalorder %s15, 3
      %p98 = pnand %p96, %p97
      %p99 = pneg %p98
      // Predicated region
      $region9: #{tpu_custom_call.1} parent=5 // pred_check
        _
      $region10: #{tpu_custom_call.1} parent=5 // pred_check_branch
        %101 = sbr.rel (%p98) target = $region12
      $region11: #{tpu_custom_call.1} parent=5 // pred_region
        %s102 = ssub.s32 %s15, 1
        // Predicated region
        $region13: #{tpu_custom_call.1} parent=11 // pred_check
          %p103 = pneg %p62
        $region14: #{tpu_custom_call.1} parent=11 // pred_check_branch
          %105 = sbr.rel (%p103) target = $region16
        $region15: #{tpu_custom_call.1} parent=11 // pred_region
          %107 = vsyncadd [#allocation5], 0
          %s109 = sshll.u32 %s1, 4
          %s110 = int_to_ptr.hbm [resolvable:$true] %s109
          %112 = dma.hbm_to_smem %s110, 16, [#allocation6], [#allocation5]
        $region16: #{tpu_custom_call.1} parent=11 // pred_fallthru
          _
      $region12: #{tpu_custom_call.1} parent=5 // pred_fallthru
        _
      %p113 = scmp.lt.s32.totalorder %s15, 2
      // Predicated region
      $region17: #{tpu_custom_call.1} parent=5 // pred_check
        %p114 = pneg %p113
      $region18: #{tpu_custom_call.1} parent=5 // pred_check_branch
        %116 = sbr.rel (%p114) target = $region20
      $region19: #{tpu_custom_call.1} parent=5 // pred_region
        // Predicated region
        $region21: #{tpu_custom_call.1} parent=19 // pred_check
          %p117 = pneg %p35
        $region22: #{tpu_custom_call.1} parent=19 // pred_check_branch
          %119 = sbr.rel (%p117) target = $region24
        $region23: #{tpu_custom_call.1} parent=19 // pred_region
          %s120 = sand.u32 %s25, 1
          %s121 = scalar_lea.sflag [#allocation3], %s120
          %s122 = sand.u32 %s25, 1
          %s123 = smul.addr %s122, 16
          %s124 = scalar_lea.vmem [#allocation2], %s123
          %126 = vsyncadd %s121, 128
          %s127 = smul.addr %s15, 2
          %s128 = smul.addr %s127, 4
          %s129 = scalar_lea.hbm %s0, %s128
          %s130 = sshll.u32 %s129, 4
          %s131 = int_to_ptr.hbm [resolvable:$true] %s130
          %s132 = sshll.u32 %s124, 4
          %s133 = int_to_ptr.vmem [resolvable:$true] %s132
          %138 = dma.hbm_to_vmem [thread:$0]  %s131, 128, %s133, %s121, 128, 128, 8
        $region24: #{tpu_custom_call.1} parent=19 // pred_fallthru
          _
      $region20: #{tpu_custom_call.1} parent=5 // pred_fallthru
        _
      %p139 = scmp.le.s32.totalorder 1, %s15
      %p140 = scmp.lt.s32.totalorder %s15, 3
      %p141 = pnand %p139, %p140
      %p142 = pneg %p141
      // Predicated region
      $region25: #{tpu_custom_call.1} parent=5 // pred_check
        _
      $region26: #{tpu_custom_call.1} parent=5 // pred_check_branch
        %144 = sbr.rel (%p141) target = $region28
      $region27: #{tpu_custom_call.1} parent=5 // pred_region
        %s145 = ssub.s32 %s15, 1
        %s146 = sand.u32 %s28, 1
        %s147 = scalar_lea.sflag [#allocation3], %s146
        %s148 = sand.u32 %s28, 1
        %s149 = smul.addr %s148, 16
        %s150 = scalar_lea.vmem [#allocation2], %s149
        // Predicated region
        $region29: #{tpu_custom_call.1} parent=27 // pred_check
          %p151 = pneg %p41
        $region30: #{tpu_custom_call.1} parent=27 // pred_check_branch
          %153 = sbr.rel (%p151) target = $region32
        $region31: #{tpu_custom_call.1} parent=27 // pred_region
          %155 = dma.done %s147, 256
        $region32: #{tpu_custom_call.1} parent=27 // pred_fallthru
          _
        // Predicated region
        $region33: #{tpu_custom_call.1} parent=27 // pred_check
          %p156 = pneg %p62
        $region34: #{tpu_custom_call.1} parent=27 // pred_check_branch
          %158 = sbr.rel (%p156) target = $region36
        $region35: #{tpu_custom_call.1} parent=27 // pred_region
          %160 = dma.done [#allocation5], 16
        $region36: #{tpu_custom_call.1} parent=27 // pred_fallthru
          _
        %161 = sfence
        %s162 = sand.u32 %s28, 1
        %s163 = scalar_lea.sflag [#allocation3], %s162
        %s164 = sand.u32 %s28, 1
        %s165 = smul.addr %s164, 16
        %s166 = scalar_lea.vmem [#allocation2], %s165
        %p167 = pneg %p41
        %p168 = pneg %p38
        %p169 = pneg %p62
        %p170 = pneg %p59
        %p171 = pneg %p88
        %p172 = pneg %p85
        %s173 = sand.u32 %s75, 1
        %s174 = scalar_lea.sflag [#allocation4], %s173
        %s175 = sand.u32 %s75, 1
        %s176 = smul.addr %s175, 16
        %s177 = scalar_lea.vmem [#allocation7], %s176
        %v178 = vld [vmem:[%s150] sm:$0xff]
        %v179 = vld [vmem:[%s150 + $0x8] sm:$0xff]
        %182 = vst [vmem:[#allocation1] ss:$2 sm:$0xff] %v178
        %s183 = scalar_lea.vmem [#allocation1], 1
        %184 = vst [vmem:[%s183] ss:$2 sm:$0xff] %v179
        %v185 = vld.sshfl [vmem:[#allocation1] sm:$0xff pattern:$0x75316420]
        %v186 = vld.sshfl [vmem:[#allocation1 + $0x8] sm:$0xff pattern:$0x75316420]
        %v189 = vadd.f32 %v185, %v186
        %190 = vadd.xlane.f32.xlu0 %v189
        %v191 = vpop.xlane.xlu0 %190
        %v192 = vmul.f32 %v191, 0.00390625
        %v193 = vlaneseq
        %v194 = vshrl.u32 %v193, 7
        %vm195 = vcmp.lt.s32.totalorder %v194, 4
        %v196 = vsel %vm195, %v192, 0.0
        %v198 = vrot.slane %v196, 7
        %vm200 = vcmask 1040384
        %v201 = vsel %vm200, 0.0, %v198
        %v202 = vrot.slane %v196, 1
        %vm204 = vcmask 1046528
        %v205 = vsel %vm204, %v202, 0.0
        %s206 = sld [smem:[#allocation6]]
        %v207 = vstv %s206
        %v208 = vmul.f32 %v207, %v201
        %s209 = sld [smem:[#allocation6 + $0x1]]
        %v210 = vstv %s209
        %v211 = vmul.f32 %v210, %v196
        %v212 = vadd.f32 %v208, %v211
        %s213 = sld [smem:[#allocation6 + $0x2]]
        %v214 = vstv %s213
        %v215 = vmul.f32 %v214, %v205
        %v216 = vadd.f32 %v212, %v215
        %v217 = vxor.u32 %v216, 2147483648
        %v218 = vmul.f32 %v217, 1.442695
        %v219 = vpow.pop %v218
        %v220 = vadd.f32 %v219, 1.0
        %v221 = vrcp.pop %v220
        %v222 = vmul.f32 %v220, %v221
        %v223 = vsub.f32 1.0, %v222
        %v224 = vmul.f32 %v221, %v223
        %v225 = vadd.f32 %v221, %v224
        %vm226 = vweird.f32 %v220
        %vm227 = vweird.f32 %v221
        %vm228 = vmor %vm226, %vm227
        %v229 = vsel %vm228, %v221, %v225
        %v230 = vand.u32 2147483647, %v220
        %vm231 = vcmp.eq.f32.partialorder %v230, 8.507059e+37
        %v232 = vand.u32 %v220, 2147483648
        %v233 = vor.u32 1.1754944e-38, %v232
        %v234 = vsel %vm231, %v233, %v229
        %v235 = vmul.f32 1.0, %v234
        %237 = vset.pattern.permute.xlu0 0
        %238 = vperm.xlu0 %237, %v235
        %v239 = vpop.permute.xlu0 %238
        %v241 = vunpack.c.l.s4 839922192
        %v242 = vunpack.c.0.s8 %v241
        %v243 = vperm.slane %v239, %v242
        %v245 = vunpack.c.l.s4 1985246804
        %v246 = vunpack.c.0.s8 %v245
        %v247 = vperm.slane %v239, %v246
        %v250 = vmul.f32 %v178, %v243
        %v251 = vmul.f32 %v179, %v247
        %252 = vst [vmem:[%s177] sm:$0xff] %v250
        %253 = vst [vmem:[%s177 + $0x8] sm:$0xff] %v251
        %s254 = sand.u32 %s75, 1
        %s255 = scalar_lea.sflag [#allocation4], %s254
        %s256 = sand.u32 %s75, 1
        %s257 = smul.addr %s256, 16
        %s258 = scalar_lea.vmem [#allocation7], %s257
        // Predicated region
        $region37: #{tpu_custom_call.1} parent=27 // pred_check
          %p259 = pneg %p85
        $region38: #{tpu_custom_call.1} parent=27 // pred_check_branch
          %261 = sbr.rel (%p259) target = $region40
        $region39: #{tpu_custom_call.1} parent=27 // pred_region
          %263 = vsyncadd %s255, 128
          %s264 = smul.addr %s20, 2
          %s265 = smul.addr %s264, 4
          %s266 = scalar_lea.hbm %s2, %s265
          %s267 = sshll.u32 %s258, 4
          %s268 = int_to_ptr.vmem [resolvable:$true] %s267
          %s269 = sshll.u32 %s266, 4
          %s270 = int_to_ptr.hbm [resolvable:$true] %s269
          %275 = dma.vmem_to_hbm [thread:$0]  %s268, 128, %s270, %s255, 128, 128, 8
        $region40: #{tpu_custom_call.1} parent=27 // pred_fallthru
          _
      $region28: #{tpu_custom_call.1} parent=5 // pred_fallthru
        _
      %p276 = scmp.le.s32.totalorder 2, %s15
      // Predicated region
      $region41: #{tpu_custom_call.1} parent=5 // pred_check
        %p277 = pneg %p276
      $region42: #{tpu_custom_call.1} parent=5 // pred_check_branch
        %279 = sbr.rel (%p277) target = $region44
      $region43: #{tpu_custom_call.1} parent=5 // pred_region
        %s280 = ssub.s32 %s15, 2
        // Predicated region
        $region45: #{tpu_custom_call.1} parent=43 // pred_check
          %p281 = pneg %p91
        $region46: #{tpu_custom_call.1} parent=43 // pred_check_branch
          %283 = sbr.rel (%p281) target = $region48
        $region47: #{tpu_custom_call.1} parent=43 // pred_region
          %s284 = sand.u32 %s76, 1
          %s285 = scalar_lea.sflag [#allocation4], %s284
          %s286 = sand.u32 %s76, 1
          %s287 = smul.addr %s286, 16
          %s288 = scalar_lea.vmem [#allocation7], %s287
          %290 = dma.done %s285, 256
        $region48: #{tpu_custom_call.1} parent=43 // pred_fallthru
          _
      $region44: #{tpu_custom_call.1} parent=5 // pred_fallthru
        _
    $region6: #{tpu_custom_call.1} parent=1 // loop_footer
      %s19 = sadd.s32 1, %s15
    $region7: #{tpu_custom_call.1} parent=1 // loop_footer_branch
      %14 = sbr.rel target = $region3
    $region8: #{tpu_custom_call.1} parent=1 // loop_exit
      _
    %291 = vsyncpa [#allocation3], 1
    %s292 = scalar_lea.sflag [#allocation3], 1
    %293 = vsyncpa %s292, 1
    %294 = vsyncpa [#allocation4], 1
    %s295 = scalar_lea.sflag [#allocation4], 1
    %296 = vsyncpa %s295, 1
    %297 = vsyncpa [#allocation5], 1
    %s298 = scalar_lea.sflag [#allocation5], 1
    %299 = vsyncpa %s298, 1

</llo_original>
